<compile_context>
chip_gen: v6e
topology: v6e:2x2x1
jax: 0.10.0
libtpu: 0.0.40
codegen_flags: <defaults>
</compile_context>

<pallas_src>
import functools

import jax
import jax.numpy as jnp
from jax.experimental import pallas as pl
from jax.experimental.pallas import tpu as pltpu


def _round_up(x, m):
    return (x + m - 1) // m * m


def _vmem_capacity_bytes():
    """Generation-aware VMEM capacity (128 MiB v5e/v6e, 64 MiB v7x)."""
    try:
        info = pltpu.get_tpu_info()
        cap = int(getattr(info, "vmem_capacity_bytes"))
        if cap > 0:
            return cap
    except Exception:
        pass
    return 64 * 1024 * 1024   # conservative fallback (v7x-sized)


def _temporal_block_kernel(x_ref, w1_ref, b1_ref, w2_ref, b2_ref, *rest,
                           K, dilation, pad_a, Lt, use_downsample):
    """One (batch, time-tile) grid step.

    x_ref : (1, Lt, Cin_p)       bf16 input tile (time -> sublanes, channels -> lanes)
    w1_ref: (K*Cin_p, Cout_p)    bf16 fused conv1 taps
    w2_ref: (K*Cout_p, Cout_p)   bf16 fused conv2 taps
    wd_ref: (Cin_p, Cout_p)      bf16 1x1 downsample weight (only if Cin != Cout)
    b*_ref: (1, Cout_p)          f32 biases
    o_ref : (1, Lt, Cout_p)      bf16 output tile
    xe_ref: (pad_a+Lt, Cin_p)    bf16 persistent: [carried context | current x tile]
    ye_ref: (pad_a+Lt, Cout_p)   bf16 persistent: [carried context | conv1 activation]
    """
    if use_downsample:
        wd_ref, bd_ref, o_ref, xe_ref, ye_ref = rest
    else:
        o_ref, xe_ref, ye_ref = rest

    # first time-tile of each batch element: causal left context is all zeros
    @pl.when(pl.program_id(1) == 0)
    def _():
        xe_ref[0:pad_a, :] = jnp.zeros((pad_a, xe_ref.shape[1]), xe_ref.dtype)
        ye_ref[0:pad_a, :] = jnp.zeros((pad_a, ye_ref.shape[1]), ye_ref.dtype)

    x_tile = x_ref[0]                          # (Lt, Cin_p) bf16
    xe_ref[pad_a:pad_a + Lt, :] = x_tile       # stage tile behind carried context

    def fused_windows(ext):
        # torch tap k reads time offset -(K-1-k)*dilation; offsets are static.
        parts = [ext[pad_a - (K - 1 - k) * dilation:
                     pad_a - (K - 1 - k) * dilation + Lt, :] for k in range(K)]
        return jnp.concatenate(parts, axis=-1)                 # (Lt, K*C)

    # ---- conv1 (causal dilated, K taps fused into one matmul) + ReLU -------
    x_ext = xe_ref[...]                                         # (pad_a+Lt, Cin_p)
    y1 = jnp.dot(fused_windows(x_ext), w1_ref[...],
                 preferred_element_type=jnp.float32)
    y1 = jnp.maximum(y1 + b1_ref[...], 0.0)
    # TODO(synk): dropout1/dropout2 are identity here (inference / eval mode).
    ye_ref[pad_a:pad_a + Lt, :] = y1.astype(jnp.bfloat16)

    # ---- conv2 (causal dilated, K taps fused into one matmul) + ReLU -------
    y1_ext = ye_ref[...]                                        # (pad_a+Lt, Cout_p)
    y2 = jnp.dot(fused_windows(y1_ext), w2_ref[...],
                 preferred_element_type=jnp.float32)
    y2 = jnp.maximum(y2 + b2_ref[...], 0.0)

    # ---- residual branch + final ReLU --------------------------------------
    if use_downsample:
        res = jnp.dot(x_tile, wd_ref[...],
                      preferred_element_type=jnp.float32) + bd_ref[...]
    else:
        res = x_tile.astype(jnp.float32)
    o_ref[0] = jnp.maximum(y2 + res, 0.0).astype(o_ref.dtype)

    # ---- carry: last pad_a rows of the extended stream -> head of scratch --
    xe_ref[0:pad_a, :] = x_ext[Lt:Lt + pad_a, :]
    ye_ref[0:pad_a, :] = y1_ext[Lt:Lt + pad_a, :]


def temporal_block_forward(x_ncl, params, *, kernel_size, stride, dilation,
                           padding, time_tile=None):
    """x_ncl: (N, Cin, L) float32 — same axis convention as PyTorch Conv1d."""
    assert stride == 1, "TCN TemporalBlock uses stride=1"
    assert padding == dilation * (kernel_size - 1), "canonical causal TCN padding"

    N, Cin, L = x_ncl.shape
    Cout = params["w1"].shape[0]            # torch weight layout: (Cout, Cin, K)
    K = kernel_size
    use_downsample = Cin != Cout
    f32 = jnp.float32

    # lane-dense channel padding; carry size aligned to bf16 vreg packing (16)
    Cin_p = _round_up(Cin, 128)
    Cout_p = _round_up(Cout, 128)
    pad_a = max(16, _round_up(padding, 16))

    # generation-aware VMEM budget (v5e/v6e: ~96 MiB, v7x: ~48 MiB)
    vmem_cap = _vmem_capacity_bytes()
    vmem_limit = min(vmem_cap * 3 // 4, 112 * 1024 * 1024)
    budget = vmem_limit - (4 << 20)          # headroom for compiler scratch

    def _vmem_est(lt):
        # double-buffered I/O blocks (x in bf16, out in bf16)
        io = 2 * lt * Cin_p * 2 + 2 * lt * Cout_p * 2
        # double-buffered fused weights + biases
        wts = 2 * K * (Cin_p + Cout_p) * Cout_p * 2 + 2 * 2 * Cout_p * 4
        if use_downsample:
            wts += 2 * Cin_p * Cout_p * 2 + 2 * Cout_p * 4
        # persistent extended-context scratches
        scr = (pad_a + lt) * (Cin_p + Cout_p) * 2
        # fused-window operands + f32 intermediates
        tmp = lt * K * (Cin_p + Cout_p) * 2 + 3 * lt * Cout_p * 4
        return io + wts + scr + tmp

    # time tile: multiple of 16, grown toward the VMEM budget (default) or
    # capped at the caller-provided hint; always >= 16, shrunk if over budget.
    Lt_cap = _round_up(L, 16)
    if time_tile is None:
        Lt = min(4096, Lt_cap)
    else:
        Lt = min(_round_up(time_tile, 16), Lt_cap)
    while Lt > 64 and _vmem_est(Lt) > budget:
        Lt = max(64, _round_up(Lt // 2, 16))
    Lt = max(Lt, 16)
    L_p = _round_up(L, Lt)
    n_lt = L_p // Lt

    # weights -> fused matmul layouts (K taps concatenated on the contraction dim)
    def fuse_conv_weight(w, cin, cin_p):
        wk = jnp.transpose(w, (2, 1, 0)).astype(f32)             # (K, cin, Cout)
        wk = jnp.pad(wk, ((0, 0), (0, cin_p - cin), (0, Cout_p - Cout)))
        return wk.reshape(K * cin_p, Cout_p).astype(jnp.bfloat16)

    w1f = fuse_conv_weight(params["w1"], Cin, Cin_p)
    w2f = fuse_conv_weight(params["w2"], Cout, Cout_p)
    b1 = jnp.pad(params["b1"].astype(f32), (0, Cout_p - Cout)).reshape(1, Cout_p)
    b2 = jnp.pad(params["b2"].astype(f32), (0, Cout_p - Cout)).reshape(1, Cout_p)

    # x: NCL -> NLC, pad channels to Cin_p and time to L_p, cast to bf16
    # TODO(synk): a stacked-TCN caller should keep this padded NLC bf16 layout
    # between blocks instead of re-doing transpose/pad/cast per block.
    x_nlc = jnp.transpose(x_ncl, (0, 2, 1)).astype(f32)
    x_nlc = jnp.pad(x_nlc, ((0, 0), (0, L_p - L), (0, Cin_p - Cin)))
    x_nlc = x_nlc.astype(jnp.bfloat16)

    inputs = [x_nlc, w1f, b1, w2f, b2]
    in_specs = [
        pl.BlockSpec((1, Lt, Cin_p), lambda b, j: (b, j, 0)),        # x tile
        pl.BlockSpec((K * Cin_p, Cout_p), lambda b, j: (0, 0)),      # w1 fused
        pl.BlockSpec((1, Cout_p), lambda b, j: (0, 0)),              # b1
        pl.BlockSpec((K * Cout_p, Cout_p), lambda b, j: (0, 0)),     # w2 fused
        pl.BlockSpec((1, Cout_p), lambda b, j: (0, 0)),              # b2
    ]
    if use_downsample:
        wd = jnp.transpose(params["wd"][:, :, 0], (1, 0)).astype(f32)  # (Cin, Cout)
        wd = jnp.pad(wd, ((0, Cin_p - Cin), (0, Cout_p - Cout))).astype(jnp.bfloat16)
        bd = jnp.pad(params["bd"].astype(f32), (0, Cout_p - Cout)).reshape(1, Cout_p)
        inputs += [wd, bd]
        in_specs += [
            pl.BlockSpec((Cin_p, Cout_p), lambda b, j: (0, 0)),      # downsample w
            pl.BlockSpec((1, Cout_p), lambda b, j: (0, 0)),          # downsample b
        ]

    kernel = functools.partial(
        _temporal_block_kernel, K=K, dilation=dilation, pad_a=pad_a, Lt=Lt,
        use_downsample=use_downsample)

    flops = 2 * N * L * K * (Cin * Cout + Cout * Cout)
    if use_downsample:
        flops += 2 * N * L * Cin * Cout
    bytes_accessed = (x_nlc.size * 2 + N * L_p * Cout_p * 2
                      + w1f.size * 2 + w2f.size * 2)

    out_nlc = pl.pallas_call(
        kernel,
        out_shape=jax.ShapeDtypeStruct((N, L_p, Cout_p), jnp.bfloat16),
        grid=(N, n_lt),
        in_specs=in_specs,
        out_specs=pl.BlockSpec((1, Lt, Cout_p), lambda b, j: (b, j, 0)),
        scratch_shapes=[
            pltpu.VMEM((pad_a + Lt, Cin_p), jnp.bfloat16),   # x extended context
            pltpu.VMEM((pad_a + Lt, Cout_p), jnp.bfloat16),  # conv1-act ext context
        ],
        compiler_params=pltpu.CompilerParams(
            dimension_semantics=("parallel", "arbitrary"),
            vmem_limit_bytes=int(vmem_limit)),
        cost_estimate=pl.CostEstimate(
            flops=flops, transcendentals=0, bytes_accessed=bytes_accessed),
    )(*inputs)

    # strip channel/time padding, back to PyTorch's (N, Cout, L) in f32
    return jnp.transpose(out_nlc[:, :L, :Cout].astype(f32), (0, 2, 1))


def _reference_forward(x, params, *, kernel_size, dilation, padding):
    """Pure-JAX (f32) reference matching the PyTorch module in eval mode."""
    del kernel_size

    def conv1d(x, w, b, pad, dil):
        y = jax.lax.conv_general_dilated(
            x, w, window_strides=(1,), padding=[(pad, pad)],
            rhs_dilation=(dil,), dimension_numbers=("NCH", "OIH", "NCH"))
        return y + b[None, :, None]

    out = conv1d(x, params["w1"], params["b1"], padding, dilation)
    out = out[:, :, :-padding]                      # Chomp1d
    out = jnp.maximum(out, 0.0)                     # ReLU (dropout = identity)
    out = conv1d(out, params["w2"], params["b2"], padding, dilation)
    out = out[:, :, :-padding]
    out = jnp.maximum(out, 0.0)
    if "wd" in params:
        res = conv1d(x, params["wd"], params["bd"], 0, 1)
    else:
        res = x
    return jnp.maximum(out + res, 0.0)


if __name__ == "__main__":
    key = jax.random.PRNGKey(0)

    def make_params(k, cin, cout, K):
        ks = jax.random.split(k, 6)
        p = {
            "w1": 0.01 * jax.random.normal(ks[0], (cout, cin, K), jnp.float32),
            "b1": 0.1 * jax.random.normal(ks[1], (cout,), jnp.float32),
            "w2": 0.01 * jax.random.normal(ks[2], (cout, cout, K), jnp.float32),
            "b2": 0.1 * jax.random.normal(ks[3], (cout,), jnp.float32),
        }
        if cin != cout:
            p["wd"] = 0.01 * jax.random.normal(ks[4], (cout, cin, 1), jnp.float32)
            p["bd"] = 0.1 * jax.random.normal(ks[5], (cout,), jnp.float32)
        return p

    # (N, Cin, Cout, L, kernel_size, dilation, time_tile)
    configs = [
        (2, 4, 8, 16, 3, 2, 256),    # downsample path, single time tile
        (2, 8, 8, 48, 3, 2, 16),     # identity residual, multi-tile (carry exercised)
        (1, 4, 8, 40, 3, 4, 16),     # downsample, multi-tile, ragged time padding
        (1, 8, 8, 1024, 3, 8, None), # budget-derived Lt (single large tile)
    ]

    key, kbase = jax.random.split(key)
    for idx, (N, Cin, Cout, L, K, dil, tt) in enumerate(configs):
        pad = (K - 1) * dil
        kp, kd = jax.random.split(jax.random.fold_in(kbase, idx))
        params = make_params(kp, Cin, Cout, K)
        x = jax.random.normal(kd, (N, Cin, L), jnp.float32)

        y = temporal_block_forward(x, params, kernel_size=K, stride=1,
                                   dilation=dil, padding=pad, time_tile=tt)
        y = jax.block_until_ready(y)

        y_ref = _reference_forward(x, params, kernel_size=K, dilation=dil,
                                   padding=pad)
        assert y.shape == (N, Cout, L)
        # bf16 matmul operands + bf16 output (f32 accumulation) => loose tolerance
        assert jnp.allclose(y, y_ref, atol=2e-2, rtol=2e-2), (
            f"mismatch vs reference in config {idx}")

    print("KERNEL_OK")
</pallas_src>

<mosaic_0001>
module attributes {stable_mosaic.version = 11 : i64} {
  func.func @_temporal_block_kernel(%arg0: i32, %arg1: i32, %arg2: memref<1x16x128xbf16, #tpu.memory_space<vmem>>, %arg3: memref<384x128xbf16, #tpu.memory_space<vmem>>, %arg4: memref<1x128xf32, #tpu.memory_space<vmem>>, %arg5: memref<384x128xbf16, #tpu.memory_space<vmem>>, %arg6: memref<1x128xf32, #tpu.memory_space<vmem>>, %arg7: memref<128x128xbf16, #tpu.memory_space<vmem>>, %arg8: memref<1x128xf32, #tpu.memory_space<vmem>>, %arg9: memref<1x16x128xbf16, #tpu.memory_space<vmem>>, %arg10: memref<32x128xbf16, #tpu.memory_space<vmem>>, %arg11: memref<32x128xbf16, #tpu.memory_space<vmem>>) attributes {dimension_semantics = [#tpu.dimension_semantics<parallel>, #tpu.dimension_semantics<arbitrary>], iteration_bounds = array<i64: 2, 1>, scalar_prefetch = 0 : i64, scratch_operands = 2 : i64, tpu.core_type = #tpu.core_type<tc>, window_params = [{transform_indices = @transform_0, window_bounds = array<i64: 1, 16, 128>}, {pipeline_mode = #tpu.pipeline_mode<synchronous>, transform_indices = @transform_1, window_bounds = array<i64: 384, 128>}, {pipeline_mode = #tpu.pipeline_mode<synchronous>, transform_indices = @transform_2, window_bounds = array<i64: 1, 128>}, {pipeline_mode = #tpu.pipeline_mode<synchronous>, transform_indices = @transform_3, window_bounds = array<i64: 384, 128>}, {pipeline_mode = #tpu.pipeline_mode<synchronous>, transform_indices = @transform_4, window_bounds = array<i64: 1, 128>}, {pipeline_mode = #tpu.pipeline_mode<synchronous>, transform_indices = @transform_5, window_bounds = array<i64: 128, 128>}, {pipeline_mode = #tpu.pipeline_mode<synchronous>, transform_indices = @transform_6, window_bounds = array<i64: 1, 128>}, {transform_indices = @transform_7, window_bounds = array<i64: 1, 16, 128>}]} {
    %c0_i32 = arith.constant 0 : i32
    %0 = arith.cmpi eq, %arg1, %c0_i32 : i32
    %1 = arith.extui %0 : i1 to i32
    %c0_i32_0 = arith.constant 0 : i32
    %2 = arith.cmpi ne, %1, %c0_i32_0 : i32
    scf.if %2 {
      %cst_34 = arith.constant 0.000000e+00 : bf16
      %48 = vector.broadcast %cst_34 : bf16 to vector<16x128xbf16>
      %c0_35 = arith.constant 0 : index
      %c0_36 = arith.constant 0 : index
      %49 = vector.load %arg10[%c0_35, %c0_36] : memref<32x128xbf16, #tpu.memory_space<vmem>>, vector<16x128xbf16>
      tpu.vector_store %arg10[%c0_35, %c0_36], %48 {strides = array<i32>} : memref<32x128xbf16, #tpu.memory_space<vmem>>, vector<16x128xbf16>,
      %cst_37 = arith.constant 0.000000e+00 : bf16
      %50 = vector.broadcast %cst_37 : bf16 to vector<16x128xbf16>
      %c0_38 = arith.constant 0 : index
      %c0_39 = arith.constant 0 : index
      %51 = vector.load %arg11[%c0_38, %c0_39] : memref<32x128xbf16, #tpu.memory_space<vmem>>, vector<16x128xbf16>
      tpu.vector_store %arg11[%c0_38, %c0_39], %50 {strides = array<i32>} : memref<32x128xbf16, #tpu.memory_space<vmem>>, vector<16x128xbf16>,
    } else {
    }
    %c0 = arith.constant 0 : index
    %c0_1 = arith.constant 0 : index
    %c0_2 = arith.constant 0 : index
    %3 = vector.load %arg2[%c0, %c0_1, %c0_2] : memref<1x16x128xbf16, #tpu.memory_space<vmem>>, vector<1x16x128xbf16>
    %4 = vector.shape_cast %3 : vector<1x16x128xbf16> to vector<16x128xbf16>
    %c16 = arith.constant 16 : index
    %c0_3 = arith.constant 0 : index
    %5 = vector.load %arg10[%c16, %c0_3] : memref<32x128xbf16, #tpu.memory_space<vmem>>, vector<16x128xbf16>
    tpu.vector_store %arg10[%c16, %c0_3], %4 {strides = array<i32>} : memref<32x128xbf16, #tpu.memory_space<vmem>>, vector<16x128xbf16>,
    %c0_4 = arith.constant 0 : index
    %c0_5 = arith.constant 0 : index
    %6 = vector.load %arg10[%c0_4, %c0_5] : memref<32x128xbf16, #tpu.memory_space<vmem>>, vector<32x128xbf16>
    %7 = vector.extract_strided_slice %6 {offsets = [12, 0], sizes = [16, 128], strides = [1, 1]} : vector<32x128xbf16> to vector<16x128xbf16>
    %8 = vector.extract_strided_slice %6 {offsets = [14, 0], sizes = [16, 128], strides = [1, 1]} : vector<32x128xbf16> to vector<16x128xbf16>
    %9 = vector.extract_strided_slice %6 {offsets = [16, 0], sizes = [16, 128], strides = [1, 1]} : vector<32x128xbf16> to vector<16x128xbf16>
    %10 = tpu.concatenate %7, %8, %9 in 1 : vector<16x128xbf16>, vector<16x128xbf16>, vector<16x128xbf16> -> vector<16x384xbf16>
    %c0_6 = arith.constant 0 : index
    %c0_7 = arith.constant 0 : index
    %11 = vector.load %arg3[%c0_6, %c0_7] : memref<384x128xbf16, #tpu.memory_space<vmem>>, vector<384x128xbf16>
    %cst = arith.constant dense<0.000000e+00> : vector<16x128xf32>
    %12 = tpu.matmul %10, %11, %cst {dimension_numbers = #tpu.dot_dimension_numbers<[1], [0], [0], [1], [0, 0, 1, 1], [], []>} : vector<16x384xbf16>, vector<384x128xbf16>, vector<16x128xf32> -> vector<16x128xf32>
    %c0_8 = arith.constant 0 : index
    %c0_9 = arith.constant 0 : index
    %13 = vector.load %arg4[%c0_8, %c0_9] : memref<1x128xf32, #tpu.memory_space<vmem>>, vector<1x128xf32>
    %14 = vector.broadcast %13 : vector<1x128xf32> to vector<16x128xf32>
    %15 = arith.addf %12, %14 : vector<16x128xf32>
    %cst_10 = arith.constant 0.000000e+00 : f32
    %16 = vector.broadcast %cst_10 : f32 to vector<16x128xf32>
    %17 = arith.maximumf %15, %16 : vector<16x128xf32>
    %18 = arith.truncf %17 : vector<16x128xf32> to vector<16x128xbf16>
    %c16_11 = arith.constant 16 : index
    %c0_12 = arith.constant 0 : index
    %19 = vector.load %arg11[%c16_11, %c0_12] : memref<32x128xbf16, #tpu.memory_space<vmem>>, vector<16x128xbf16>
    tpu.vector_store %arg11[%c16_11, %c0_12], %18 {strides = array<i32>} : memref<32x128xbf16, #tpu.memory_space<vmem>>, vector<16x128xbf16>,
    %c0_13 = arith.constant 0 : index
    %c0_14 = arith.constant 0 : index
    %20 = vector.load %arg11[%c0_13, %c0_14] : memref<32x128xbf16, #tpu.memory_space<vmem>>, vector<32x128xbf16>
    %21 = vector.extract_strided_slice %20 {offsets = [12, 0], sizes = [16, 128], strides = [1, 1]} : vector<32x128xbf16> to vector<16x128xbf16>
    %22 = vector.extract_strided_slice %20 {offsets = [14, 0], sizes = [16, 128], strides = [1, 1]} : vector<32x128xbf16> to vector<16x128xbf16>
    %23 = vector.extract_strided_slice %20 {offsets = [16, 0], sizes = [16, 128], strides = [1, 1]} : vector<32x128xbf16> to vector<16x128xbf16>
    %24 = tpu.concatenate %21, %22, %23 in 1 : vector<16x128xbf16>, vector<16x128xbf16>, vector<16x128xbf16> -> vector<16x384xbf16>
    %c0_15 = arith.constant 0 : index
    %c0_16 = arith.constant 0 : index
    %25 = vector.load %arg5[%c0_15, %c0_16] : memref<384x128xbf16, #tpu.memory_space<vmem>>, vector<384x128xbf16>
    %cst_17 = arith.constant dense<0.000000e+00> : vector<16x128xf32>
    %26 = tpu.matmul %24, %25, %cst_17 {dimension_numbers = #tpu.dot_dimension_numbers<[1], [0], [0], [1], [0, 0, 1, 1], [], []>} : vector<16x384xbf16>, vector<384x128xbf16>, vector<16x128xf32> -> vector<16x128xf32>
    %c0_18 = arith.constant 0 : index
    %c0_19 = arith.constant 0 : index
    %27 = vector.load %arg6[%c0_18, %c0_19] : memref<1x128xf32, #tpu.memory_space<vmem>>, vector<1x128xf32>
    %28 = vector.broadcast %27 : vector<1x128xf32> to vector<16x128xf32>
    %29 = arith.addf %26, %28 : vector<16x128xf32>
    %cst_20 = arith.constant 0.000000e+00 : f32
    %30 = vector.broadcast %cst_20 : f32 to vector<16x128xf32>
    %31 = arith.maximumf %29, %30 : vector<16x128xf32>
    %c0_21 = arith.constant 0 : index
    %c0_22 = arith.constant 0 : index
    %32 = vector.load %arg7[%c0_21, %c0_22] : memref<128x128xbf16, #tpu.memory_space<vmem>>, vector<128x128xbf16>
    %cst_23 = arith.constant dense<0.000000e+00> : vector<16x128xf32>
    %33 = tpu.matmul %4, %32, %cst_23 {dimension_numbers = #tpu.dot_dimension_numbers<[1], [0], [0], [1], [0, 0, 1, 1], [], []>} : vector<16x128xbf16>, vector<128x128xbf16>, vector<16x128xf32> -> vector<16x128xf32>
    %c0_24 = arith.constant 0 : index
    %c0_25 = arith.constant 0 : index
    %34 = vector.load %arg8[%c0_24, %c0_25] : memref<1x128xf32, #tpu.memory_space<vmem>>, vector<1x128xf32>
    %35 = vector.broadcast %34 : vector<1x128xf32> to vector<16x128xf32>
    %36 = arith.addf %33, %35 : vector<16x128xf32>
    %37 = arith.addf %31, %36 : vector<16x128xf32>
    %cst_26 = arith.constant 0.000000e+00 : f32
    %38 = vector.broadcast %cst_26 : f32 to vector<16x128xf32>
    %39 = arith.maximumf %37, %38 : vector<16x128xf32>
    %40 = arith.truncf %39 : vector<16x128xf32> to vector<16x128xbf16>
    %c0_27 = arith.constant 0 : index
    %c0_28 = arith.constant 0 : index
    %c0_29 = arith.constant 0 : index
    %41 = vector.load %arg9[%c0_27, %c0_28, %c0_29] : memref<1x16x128xbf16, #tpu.memory_space<vmem>>, vector<1x16x128xbf16>
    %42 = vector.shape_cast %41 : vector<1x16x128xbf16> to vector<16x128xbf16>
    %43 = vector.shape_cast %40 : vector<16x128xbf16> to vector<1x16x128xbf16>
    tpu.vector_store %arg9[%c0_27, %c0_28, %c0_29], %43 {strides = array<i32>} : memref<1x16x128xbf16, #tpu.memory_space<vmem>>, vector<1x16x128xbf16>,
    %44 = vector.extract_strided_slice %6 {offsets = [16, 0], sizes = [16, 128], strides = [1, 1]} : vector<32x128xbf16> to vector<16x128xbf16>
    %c0_30 = arith.constant 0 : index
    %c0_31 = arith.constant 0 : index
    %45 = vector.load %arg10[%c0_30, %c0_31] : memref<32x128xbf16, #tpu.memory_space<vmem>>, vector<16x128xbf16>
    tpu.vector_store %arg10[%c0_30, %c0_31], %44 {strides = array<i32>} : memref<32x128xbf16, #tpu.memory_space<vmem>>, vector<16x128xbf16>,
    %46 = vector.extract_strided_slice %20 {offsets = [16, 0], sizes = [16, 128], strides = [1, 1]} : vector<32x128xbf16> to vector<16x128xbf16>
    %c0_32 = arith.constant 0 : index
    %c0_33 = arith.constant 0 : index
    %47 = vector.load %arg11[%c0_32, %c0_33] : memref<32x128xbf16, #tpu.memory_space<vmem>>, vector<16x128xbf16>
    tpu.vector_store %arg11[%c0_32, %c0_33], %46 {strides = array<i32>} : memref<32x128xbf16, #tpu.memory_space<vmem>>, vector<16x128xbf16>,
    return
  }
  func.func @transform_0(%arg0: i32, %arg1: i32) -> (i32, i32, i32) {
    %c0_i32 = arith.constant 0 : i32
    %c0_i32_0 = arith.constant 0 : i32
    return %arg0, %arg1, %c0_i32 : i32, i32, i32
  }
  func.func @transform_1(%arg0: i32, %arg1: i32) -> (i32, i32) {
    %c0_i32 = arith.constant 0 : i32
    %c0_i32_0 = arith.constant 0 : i32
    %c0_i32_1 = arith.constant 0 : i32
    return %c0_i32, %c0_i32_0 : i32, i32
  }
  func.func @transform_2(%arg0: i32, %arg1: i32) -> (i32, i32) {
    %c0_i32 = arith.constant 0 : i32
    %c0_i32_0 = arith.constant 0 : i32
    %c0_i32_1 = arith.constant 0 : i32
    return %c0_i32, %c0_i32_0 : i32, i32
  }
  func.func @transform_3(%arg0: i32, %arg1: i32) -> (i32, i32) {
    %c0_i32 = arith.constant 0 : i32
    %c0_i32_0 = arith.constant 0 : i32
    %c0_i32_1 = arith.constant 0 : i32
    return %c0_i32, %c0_i32_0 : i32, i32
  }
  func.func @transform_4(%arg0: i32, %arg1: i32) -> (i32, i32) {
    %c0_i32 = arith.constant 0 : i32
    %c0_i32_0 = arith.constant 0 : i32
    %c0_i32_1 = arith.constant 0 : i32
    return %c0_i32, %c0_i32_0 : i32, i32
  }
  func.func @transform_5(%arg0: i32, %arg1: i32) -> (i32, i32) {
    %c0_i32 = arith.constant 0 : i32
    %c0_i32_0 = arith.constant 0 : i32
    %c0_i32_1 = arith.constant 0 : i32
    return %c0_i32, %c0_i32_0 : i32, i32
  }
  func.func @transform_6(%arg0: i32, %arg1: i32) -> (i32, i32) {
    %c0_i32 = arith.constant 0 : i32
    %c0_i32_0 = arith.constant 0 : i32
    %c0_i32_1 = arith.constant 0 : i32
    return %c0_i32, %c0_i32_0 : i32, i32
  }
  func.func @transform_7(%arg0: i32, %arg1: i32) -> (i32, i32, i32) {
    %c0_i32 = arith.constant 0 : i32
    %c0_i32_0 = arith.constant 0 : i32
    return %arg0, %arg1, %c0_i32 : i32, i32, i32
  }
}

</mosaic_0001>

<llo_original>
// kernel: tpu_custom_call.1
$region0: #{tpu_custom_call.1}
  #allocation0 [shape = 'u32[]', space=smem, size = 0x4, offset = 0x4, fixed_abs, tag = 'smem constant byte address 0x4 - core index']
  #allocation1 [shape = 'u32[144,128]{1,0:T(1,128)}', space=vmem, size = 0x12000, scoped, tag = 'internal scratch']
  #allocation2 [shape = 'bf16[32,128]{1,0:T(8,128)(2,1)}', space=vmem, size = 0x2000, scoped, tag = 'scratch operand']
  #allocation3 [shape = 'bf16[32,128]{1,0:T(8,128)(2,1)}', space=vmem, size = 0x2000, scoped, tag = 'scratch operand']
  %s0 = inlined_call_operand.hbm [shape: bf16[2,16,128], index: 0, kind: input, shape index: {}]
  %s1 = inlined_call_operand.hbm [shape: bf16[384,128], index: 1, kind: input, shape index: {}]
  %s2 = inlined_call_operand.vmem [shape: f32[1,128], index: 2, kind: input, shape index: {}]
  %s3 = inlined_call_operand.hbm [shape: bf16[384,128], index: 3, kind: input, shape index: {}]
  %s4 = inlined_call_operand.vmem [shape: f32[1,128], index: 4, kind: input, shape index: {}]
  %s5 = inlined_call_operand.hbm [shape: bf16[128,128], index: 5, kind: input, shape index: {}]
  %s6 = inlined_call_operand.vmem [shape: f32[1,128], index: 6, kind: input, shape index: {}]
  %s7 = inlined_call_operand.hbm [shape: bf16[2,16,128], index: 7, kind: output, shape index: {}]
  %s8 = sld [smem:[#allocation0]]
  $region81: #{tpu_custom_call.1} parent=0
    _
  %s10 = ssub.s32 1, %s8
  %s11 = scalar_select 0, %s10, %s8
  $region1: #{tpu_custom_call.1} parent=0
    #allocation4 [shape = 'u8[8192]{0}', space=vmem, size = 0x2000, scoped, tag = 'input window, operand 0']
    #allocation5 [shape = 's32[2]{0}', space=sflag, size = 0x8, scoped, tag = 'scoped memory for tpu_custom_call.1']
    #allocation6 [shape = 's32[2]{0}', space=sflag, size = 0x8, scoped, tag = 'scoped memory for tpu_custom_call.1']
    #allocation7 [shape = 'u8[98304]{0}', space=vmem, size = 0x18000, scoped, tag = 'input window, operand 1, single buffered']
    #allocation8 [shape = 's32[1]{0}', space=sflag, size = 0x4, scoped, tag = 'scoped memory for tpu_custom_call.1']
    #allocation9 [shape = 'u8[98304]{0}', space=vmem, size = 0x18000, scoped, tag = 'input window, operand 3, single buffered']
    #allocation10 [shape = 'u8[32768]{0}', space=vmem, size = 0x8000, scoped, tag = 'input window, operand 5, single buffered']
    #allocation11 [shape = 's32[1]{0}', space=sflag, size = 0x4, scoped, tag = 'scoped memory for tpu_custom_call.1']
    #allocation12 [shape = 'u8[8192]{0}', space=vmem, size = 0x2000, scoped, tag = 'output window, operand 0']
    %12 = vsyncpa [#allocation5], 0
    %s13 = scalar_lea.sflag [#allocation5], 1
    %14 = vsyncpa %s13, 0
    %15 = vsyncpa [#allocation8], 0
    %16 = vsyncpa [#allocation11], 0
    %17 = vsyncpa [#allocation6], 0
    %s18 = scalar_lea.sflag [#allocation6], 1
    %19 = vsyncpa %s18, 0
    loop: start=0, step=1, limit=4
    $region2: #{tpu_custom_call.1} parent=1 // loop_pre_header
      _
    $region3: #{tpu_custom_call.1} parent=1 // loop_header
      %s21 = sphi 0, %s25
      %p22 = scmp.ge.s32.totalorder %s21, 4
      %s28 = sphi 0, %s40
      %s29 = sphi 0, %s36
      %s30 = sphi 0, %s28
      %s31 = sphi 0, %s29
      %s32 = sphi 0, %s30
      %s33 = sphi 0, %s31
      %s45 = sphi 0, %s47
      %s48 = sphi 0, %s45
      %s49 = sphi 0, %s48
      %s65 = sphi 0, %s49
      %s69 = sphi 0, %s69
      %s71 = sphi 0, %s69
      %s72 = sphi 0, %s71
      %s86 = sphi 0, %s72
      %s90 = sphi 0, %s90
      %s92 = sphi 0, %s90
      %s93 = sphi 0, %s92
      %s107 = sphi 0, %s93
      %s111 = sphi 0, %s111
      %s113 = sphi 0, %s111
      %s114 = sphi 0, %s113
      %s128 = sphi 0, %s114
      %s132 = sphi 0, %s132
      %s134 = sphi 0, %s132
      %s135 = sphi 0, %s134
      %s149 = sphi 0, %s135
      %s153 = sphi 0, %s153
      %s155 = sphi 0, %s153
      %s156 = sphi 0, %s155
      %s170 = sphi 0, %s156
      %s174 = sphi 0, %s174
      %s176 = sphi 0, %s174
      %s177 = sphi 0, %s176
      %s191 = sphi 0, %s177
      %s199 = sphi 0, %s201
      %s202 = sphi 0, %s199
      %s203 = sphi 0, %s202
      %s219 = sphi 0, %s203
    $region4: #{tpu_custom_call.1} parent=1 // loop_header_branch
      %24 = sbr.rel (%p22) target = $region8
    $region5: #{tpu_custom_call.1} parent=1 // loop_body
      %s26 = ssub.s32 %s21, 1
      %s27 = ssub.s32 %s21, 2
      %s34 = sadd.s32 1, %s29
      %p35 = scmp.ge.s32.totalorder %s34, 1
      %s36 = scalar_select %p35, 0, %s34
      %s37 = sadd.s32 1, %s28
      %s38 = scalar_select %p35, %s37, %s28
      %p39 = scmp.ge.s32.totalorder %s38, 2
      %s40 = scalar_select %p39, 0, %s38
      %s41 = ssub.s32 %s28, %s40
      %s42 = ssub.s32 %s29, %s36
      %s43 = sor.u32 %s41, %s42
      %p44 = scmp.eq.s32.totalorder %s43, 0
      %s46 = sadd.s32 %s45, 1
      %s47 = scalar_select %p44, %s45, %s46
      %p50 = pneg %p44
      %p51 = scmp.eq.s32.totalorder %s21, 1
      %p52 = por %p50, %p51
      %p53 = scmp.ne.s32.totalorder %s45, %s48
      %p54 = scmp.eq.s32.totalorder %s21, 0
      %p55 = por %p53, %p54
      %p56 = scmp.ne.s32.totalorder %s45, %s48
      %p57 = scmp.eq.s32.totalorder %s26, 1
      %p58 = por %p56, %p57
      %p59 = scmp.ne.s32.totalorder %s48, %s49
      %p60 = scmp.eq.s32.totalorder %s26, 0
      %p61 = por %p59, %p60
      %p62 = scmp.ne.s32.totalorder %s48, %s49
      %p63 = scmp.eq.s32.totalorder %s27, 1
      %p64 = por %p62, %p63
      %p66 = scmp.ne.s32.totalorder %s49, %s65
      %p67 = scmp.eq.s32.totalorder %s27, 0
      %p68 = por %p66, %p67
      %s70 = sadd.s32 %s69, 1
      %p73 = scmp.eq.s32.totalorder %s21, 1
      %p74 = scmp.ne.s32.totalorder %s69, %s71
      %p75 = scmp.eq.s32.totalorder %s21, 0
      %p76 = por %p74, %p75
      %p77 = scmp.ne.s32.totalorder %s69, %s71
      %p78 = scmp.eq.s32.totalorder %s26, 1
      %p79 = por %p77, %p78
      %p80 = scmp.ne.s32.totalorder %s71, %s72
      %p81 = scmp.eq.s32.totalorder %s26, 0
      %p82 = por %p80, %p81
      %p83 = scmp.ne.s32.totalorder %s71, %s72
      %p84 = scmp.eq.s32.totalorder %s27, 1
      %p85 = por %p83, %p84
      %p87 = scmp.ne.s32.totalorder %s72, %s86
      %p88 = scmp.eq.s32.totalorder %s27, 0
      %p89 = por %p87, %p88
      %s91 = sadd.s32 %s90, 1
      %p94 = scmp.eq.s32.totalorder %s21, 1
      %p95 = scmp.ne.s32.totalorder %s90, %s92
      %p96 = scmp.eq.s32.totalorder %s21, 0
      %p97 = por %p95, %p96
      %p98 = scmp.ne.s32.totalorder %s90, %s92
      %p99 = scmp.eq.s32.totalorder %s26, 1
      %p100 = por %p98, %p99
      %p101 = scmp.ne.s32.totalorder %s92, %s93
      %p102 = scmp.eq.s32.totalorder %s26, 0
      %p103 = por %p101, %p102
      %p104 = scmp.ne.s32.totalorder %s92, %s93
      %p105 = scmp.eq.s32.totalorder %s27, 1
      %p106 = por %p104, %p105
      %p108 = scmp.ne.s32.totalorder %s93, %s107
      %p109 = scmp.eq.s32.totalorder %s27, 0
      %p110 = por %p108, %p109
      %s112 = sadd.s32 %s111, 1
      %p115 = scmp.eq.s32.totalorder %s21, 1
      %p116 = scmp.ne.s32.totalorder %s111, %s113
      %p117 = scmp.eq.s32.totalorder %s21, 0
      %p118 = por %p116, %p117
      %p119 = scmp.ne.s32.totalorder %s111, %s113
      %p120 = scmp.eq.s32.totalorder %s26, 1
      %p121 = por %p119, %p120
      %p122 = scmp.ne.s32.totalorder %s113, %s114
      %p123 = scmp.eq.s32.totalorder %s26, 0
      %p124 = por %p122, %p123
      %p125 = scmp.ne.s32.totalorder %s113, %s114
      %p126 = scmp.eq.s32.totalorder %s27, 1
      %p127 = por %p125, %p126
      %p129 = scmp.ne.s32.totalorder %s114, %s128
      %p130 = scmp.eq.s32.totalorder %s27, 0
      %p131 = por %p129, %p130
      %s133 = sadd.s32 %s132, 1
      %p136 = scmp.eq.s32.totalorder %s21, 1
      %p137 = scmp.ne.s32.totalorder %s132, %s134
      %p138 = scmp.eq.s32.totalorder %s21, 0
      %p139 = por %p137, %p138
      %p140 = scmp.ne.s32.totalorder %s132, %s134
      %p141 = scmp.eq.s32.totalorder %s26, 1
      %p142 = por %p140, %p141
      %p143 = scmp.ne.s32.totalorder %s134, %s135
      %p144 = scmp.eq.s32.totalorder %s26, 0
      %p145 = por %p143, %p144
      %p146 = scmp.ne.s32.totalorder %s134, %s135
      %p147 = scmp.eq.s32.totalorder %s27, 1
      %p148 = por %p146, %p147
      %p150 = scmp.ne.s32.totalorder %s135, %s149
      %p151 = scmp.eq.s32.totalorder %s27, 0
      %p152 = por %p150, %p151
      %s154 = sadd.s32 %s153, 1
      %p157 = scmp.eq.s32.totalorder %s21, 1
      %p158 = scmp.ne.s32.totalorder %s153, %s155
      %p159 = scmp.eq.s32.totalorder %s21, 0
      %p160 = por %p158, %p159
      %p161 = scmp.ne.s32.totalorder %s153, %s155
      %p162 = scmp.eq.s32.totalorder %s26, 1
      %p163 = por %p161, %p162
      %p164 = scmp.ne.s32.totalorder %s155, %s156
      %p165 = scmp.eq.s32.totalorder %s26, 0
      %p166 = por %p164, %p165
      %p167 = scmp.ne.s32.totalorder %s155, %s156
      %p168 = scmp.eq.s32.totalorder %s27, 1
      %p169 = por %p167, %p168
      %p171 = scmp.ne.s32.totalorder %s156, %s170
      %p172 = scmp.eq.s32.totalorder %s27, 0
      %p173 = por %p171, %p172
      %s175 = sadd.s32 %s174, 1
      %p178 = scmp.eq.s32.totalorder %s21, 1
      %p179 = scmp.ne.s32.totalorder %s174, %s176
      %p180 = scmp.eq.s32.totalorder %s21, 0
      %p181 = por %p179, %p180
      %p182 = scmp.ne.s32.totalorder %s174, %s176
      %p183 = scmp.eq.s32.totalorder %s26, 1
      %p184 = por %p182, %p183
      %p185 = scmp.ne.s32.totalorder %s176, %s177
      %p186 = scmp.eq.s32.totalorder %s26, 0
      %p187 = por %p185, %p186
      %p188 = scmp.ne.s32.totalorder %s176, %s177
      %p189 = scmp.eq.s32.totalorder %s27, 1
      %p190 = por %p188, %p189
      %p192 = scmp.ne.s32.totalorder %s177, %s191
      %p193 = scmp.eq.s32.totalorder %s27, 0
      %p194 = por %p192, %p193
      %s195 = ssub.s32 %s28, %s40
      %s196 = ssub.s32 %s29, %s36
      %s197 = sor.u32 %s195, %s196
      %p198 = scmp.eq.s32.totalorder %s197, 0
      %s200 = sadd.s32 %s199, 1
      %s201 = scalar_select %p198, %s199, %s200
      %p204 = pneg %p198
      %p205 = scmp.eq.s32.totalorder %s21, 1
      %p206 = por %p204, %p205
      %p207 = scmp.ne.s32.totalorder %s199, %s202
      %p208 = scmp.eq.s32.totalorder %s21, 0
      %p209 = por %p207, %p208
      %p210 = scmp.ne.s32.totalorder %s199, %s202
      %p211 = scmp.eq.s32.totalorder %s26, 1
      %p212 = por %p210, %p211
      %p213 = scmp.ne.s32.totalorder %s202, %s203
      %p214 = scmp.eq.s32.totalorder %s26, 0
      %p215 = por %p213, %p214
      %p216 = scmp.ne.s32.totalorder %s202, %s203
      %p217 = scmp.eq.s32.totalorder %s27, 1
      %p218 = por %p216, %p217
      %p220 = scmp.ne.s32.totalorder %s203, %s219
      %p221 = scmp.eq.s32.totalorder %s27, 0
      %p222 = por %p220, %p221
      %p223 = scmp.le.s32.totalorder 1, %s21
      %p224 = scmp.lt.s32.totalorder %s21, 3
      %p225 = pnand %p223, %p224
      %p226 = pneg %p225
      // Predicated region
      $region9: #{tpu_custom_call.1} parent=5 // pred_check
        _
      $region10: #{tpu_custom_call.1} parent=5 // pred_check_branch
        %228 = sbr.rel (%p225) target = $region12
      $region11: #{tpu_custom_call.1} parent=5 // pred_region
        %s229 = ssub.s32 %s21, 1
        // Predicated region
        $region13: #{tpu_custom_call.1} parent=11 // pred_check
          %p230 = pneg %p82
        $region14: #{tpu_custom_call.1} parent=11 // pred_check_branch
          %232 = sbr.rel (%p230) target = $region16
        $region15: #{tpu_custom_call.1} parent=11 // pred_region
          %s234 = ssub.s32 3072, 3072
          %235 = vsyncadd [#allocation8], %s234
          %s236 = sshll.u32 [#allocation7], 4
          %s237 = int_to_ptr.vmem [resolvable:$true] %s236
          %242 = dma.hbm_to_vmem [thread:$0]  %s1, 3072, %s237, [#allocation8], 64, 64, 4
        $region16: #{tpu_custom_call.1} parent=11 // pred_fallthru
          _
        // Predicated region
        $region17: #{tpu_custom_call.1} parent=11 // pred_check
          %p243 = pneg %p103
        $region18: #{tpu_custom_call.1} parent=11 // pred_check_branch
          %245 = sbr.rel (%p243) target = $region20
        $region19: #{tpu_custom_call.1} parent=11 // pred_region
          _
        $region20: #{tpu_custom_call.1} parent=11 // pred_fallthru
          _
        // Predicated region
        $region21: #{tpu_custom_call.1} parent=11 // pred_check
          %p246 = pneg %p124
        $region22: #{tpu_custom_call.1} parent=11 // pred_check_branch
          %248 = sbr.rel (%p246) target = $region24
        $region23: #{tpu_custom_call.1} parent=11 // pred_region
          %s250 = ssub.s32 3072, 3072
          %251 = vsyncadd [#allocation8], %s250
          %s252 = sshll.u32 [#allocation9], 4
          %s253 = int_to_ptr.vmem [resolvable:$true] %s252
          %258 = dma.hbm_to_vmem [thread:$0]  %s3, 3072, %s253, [#allocation8], 64, 64, 4
        $region24: #{tpu_custom_call.1} parent=11 // pred_fallthru
          _
        // Predicated region
        $region25: #{tpu_custom_call.1} parent=11 // pred_check
          %p259 = pneg %p145
        $region26: #{tpu_custom_call.1} parent=11 // pred_check_branch
          %261 = sbr.rel (%p259) target = $region28
        $region27: #{tpu_custom_call.1} parent=11 // pred_region
          _
        $region28: #{tpu_custom_call.1} parent=11 // pred_fallthru
          _
        // Predicated region
        $region29: #{tpu_custom_call.1} parent=11 // pred_check
          %p262 = pneg %p166
        $region30: #{tpu_custom_call.1} parent=11 // pred_check_branch
          %264 = sbr.rel (%p262) target = $region32
        $region31: #{tpu_custom_call.1} parent=11 // pred_region
          %s266 = ssub.s32 1024, 1024
          %267 = vsyncadd [#allocation11], %s266
          %s268 = sshll.u32 [#allocation10], 4
          %s269 = int_to_ptr.vmem [resolvable:$true] %s268
          %274 = dma.hbm_to_vmem [thread:$0]  %s5, 1024, %s269, [#allocation11], 64, 64, 4
        $region32: #{tpu_custom_call.1} parent=11 // pred_fallthru
          _
        // Predicated region
        $region33: #{tpu_custom_call.1} parent=11 // pred_check
          %p275 = pneg %p187
        $region34: #{tpu_custom_call.1} parent=11 // pred_check_branch
          %277 = sbr.rel (%p275) target = $region36
        $region35: #{tpu_custom_call.1} parent=11 // pred_region
          _
        $region36: #{tpu_custom_call.1} parent=11 // pred_fallthru
          _
      $region12: #{tpu_custom_call.1} parent=5 // pred_fallthru
        _
      %p278 = scmp.lt.s32.totalorder %s21, 2
      // Predicated region
      $region37: #{tpu_custom_call.1} parent=5 // pred_check
        %p279 = pneg %p278
      $region38: #{tpu_custom_call.1} parent=5 // pred_check_branch
        %281 = sbr.rel (%p279) target = $region40
      $region39: #{tpu_custom_call.1} parent=5 // pred_region
        // Predicated region
        $region41: #{tpu_custom_call.1} parent=39 // pred_check
          %p282 = pneg %p55
        $region42: #{tpu_custom_call.1} parent=39 // pred_check_branch
          %284 = sbr.rel (%p282) target = $region44
        $region43: #{tpu_custom_call.1} parent=39 // pred_region
          %s285 = sand.u32 %s45, 1
          %s286 = scalar_lea.sflag [#allocation5], %s285
          %s287 = sand.u32 %s45, 1
          %s288 = smul.addr %s287, 8
          %s289 = scalar_lea.vmem [#allocation4], %s288
          %s290 = smul.u32 2, %s29
          %s292 = ssub.s32 128, 128
          %293 = vsyncadd %s286, %s292
          %s294 = smul.addr %s28, 2
          %s295 = sadd.s32 %s290, %s294
          %s296 = smul.addr %s295, 64
          %s297 = scalar_lea.hbm %s0, %s296
          %s298 = sshll.u32 %s289, 4
          %s299 = int_to_ptr.vmem [resolvable:$true] %s298
          %304 = dma.hbm_to_vmem [thread:$0]  %s297, 128, %s299, %s286, 64, 64, 4
        $region44: #{tpu_custom_call.1} parent=39 // pred_fallthru
          _
      $region40: #{tpu_custom_call.1} parent=5 // pred_fallthru
        _
      %p305 = scmp.le.s32.totalorder 1, %s21
      %p306 = scmp.lt.s32.totalorder %s21, 3
      %p307 = pnand %p305, %p306
      %p308 = pneg %p307
      // Predicated region
      $region45: #{tpu_custom_call.1} parent=5 // pred_check
        _
      $region46: #{tpu_custom_call.1} parent=5 // pred_check_branch
        %310 = sbr.rel (%p307) target = $region48
      $region47: #{tpu_custom_call.1} parent=5 // pred_region
        %s311 = ssub.s32 %s21, 1
        %s312 = sand.u32 %s48, 1
        %s313 = scalar_lea.sflag [#allocation5], %s312
        %s314 = sand.u32 %s48, 1
        %s315 = smul.addr %s314, 8
        %s316 = scalar_lea.vmem [#allocation4], %s315
        // Predicated region
        $region49: #{tpu_custom_call.1} parent=47 // pred_check
          %p317 = pneg %p61
        $region50: #{tpu_custom_call.1} parent=47 // pred_check_branch
          %319 = sbr.rel (%p317) target = $region52
        $region51: #{tpu_custom_call.1} parent=47 // pred_region
          %320 = dma.done %s313, 128
        $region52: #{tpu_custom_call.1} parent=47 // pred_fallthru
          _
        // Predicated region
        $region53: #{tpu_custom_call.1} parent=47 // pred_check
          %p321 = pneg %p82
        $region54: #{tpu_custom_call.1} parent=47 // pred_check_branch
          %323 = sbr.rel (%p321) target = $region56
        $region55: #{tpu_custom_call.1} parent=47 // pred_region
          %324 = dma.done [#allocation8], 3072
        $region56: #{tpu_custom_call.1} parent=47 // pred_fallthru
          _
        // Predicated region
        $region57: #{tpu_custom_call.1} parent=47 // pred_check
          %p325 = pneg %p124
        $region58: #{tpu_custom_call.1} parent=47 // pred_check_branch
          %327 = sbr.rel (%p325) target = $region60
        $region59: #{tpu_custom_call.1} parent=47 // pred_region
          %328 = dma.done [#allocation8], 3072
        $region60: #{tpu_custom_call.1} parent=47 // pred_fallthru
          _
        // Predicated region
        $region61: #{tpu_custom_call.1} parent=47 // pred_check
          %p329 = pneg %p166
        $region62: #{tpu_custom_call.1} parent=47 // pred_check_branch
          %331 = sbr.rel (%p329) target = $region64
        $region63: #{tpu_custom_call.1} parent=47 // pred_region
          %332 = dma.done [#allocation11], 1024
        $region64: #{tpu_custom_call.1} parent=47 // pred_fallthru
          _
        %s333 = sand.u32 %s48, 1
        %s334 = scalar_lea.sflag [#allocation5], %s333
        %s335 = sand.u32 %s48, 1
        %s336 = smul.addr %s335, 8
        %s337 = scalar_lea.vmem [#allocation4], %s336
        %p338 = pneg %p61
        %p339 = pneg %p58
        %p340 = pneg %p82
        %p341 = pneg %p79
        %p342 = pneg %p103
        %p343 = pneg %p100
        %p344 = pneg %p124
        %p345 = pneg %p121
        %p346 = pneg %p145
        %p347 = pneg %p142
        %p348 = pneg %p166
        %p349 = pneg %p163
        %p350 = pneg %p187
        %p351 = pneg %p184
        %p352 = pneg %p215
        %p353 = pneg %p212
        %s354 = sand.u32 %s202, 1
        %s355 = scalar_lea.sflag [#allocation6], %s354
        %s356 = sand.u32 %s202, 1
        %s357 = smul.addr %s356, 8
        %s358 = scalar_lea.vmem [#allocation12], %s357
        %s359 = smul.u32 2, %s31
        %s360 = smul.u32 2, %s31
        %p362 = scmp.eq.s32.totalorder %s31, 0
        // Predicated region
        $region65: #{tpu_custom_call.1} parent=47 // pred_check
          %p363 = pneg %p362
        $region66: #{tpu_custom_call.1} parent=47 // pred_check_branch
          %365 = sbr.rel (%p363) target = $region68
        $region67: #{tpu_custom_call.1} parent=47 // pred_region
          %366 = vst [vmem:[#allocation2] sm:$0xf] 0
          %367 = vst [vmem:[#allocation2 + $0x4] sm:$0xf] 0
          %368 = vst [vmem:[#allocation3] sm:$0xf] 0
          %369 = vst [vmem:[#allocation3 + $0x4] sm:$0xf] 0
        $region68: #{tpu_custom_call.1} parent=47 // pred_fallthru
          _
        %v370 = vld [vmem:[%s316] sm:$0xf]
        %v371 = vld [vmem:[%s316 + $0x4] sm:$0xf]
        %372 = vst [vmem:[#allocation2 + $0x8] sm:$0xf] %v370
        %373 = vst [vmem:[#allocation2 + $0xc] sm:$0xf] %v371
        %v374 = vld [vmem:[#allocation2 + $0x4] sm:$0xf]
        %v375 = vld [vmem:[#allocation2 + $0x8] sm:$0xf]
        %v376 = vld [vmem:[#allocation2 + $0xc] sm:$0xf]
        %v380 = vunpack.c.l.b16 %v374
        %v381 = vunpack.c.l.b16 %v375
        %v382 = vunpack.c.l.b16 %v376
        %v383 = vpack.c.b16 %v381, %v380
        %v384 = vpack.c.b16 %v382, %v382
        %vm385 = vcmask 1046528
        %v386 = vrot.slane %v383, 1
        %v387 = vrot.slane %v384, 1
        %v388 = vsel %vm385, %v386, %v387
        %v389 = vpack.c.b16 %v382, %v381
        %v390 = vrot.slane %v389, 6
        %v391 = vld [vmem:[#allocation7] sm:$0xf]
        %v392 = vld [vmem:[#allocation7 + $0x4] sm:$0xf]
        %v393 = vld [vmem:[#allocation7 + $0x8] sm:$0xf]
        %v394 = vld [vmem:[#allocation7 + $0xc] sm:$0xf]
        %v395 = vld [vmem:[#allocation7 + $0x10] sm:$0xf]
        %v396 = vld [vmem:[#allocation7 + $0x14] sm:$0xf]
        %v397 = vld [vmem:[#allocation7 + $0x18] sm:$0xf]
        %v398 = vld [vmem:[#allocation7 + $0x1c] sm:$0xf]
        %v399 = vld [vmem:[#allocation7 + $0x20] sm:$0xf]
        %v400 = vld [vmem:[#allocation7 + $0x24] sm:$0xf]
        %v401 = vld [vmem:[#allocation7 + $0x28] sm:$0xf]
        %v402 = vld [vmem:[#allocation7 + $0x2c] sm:$0xf]
        %v403 = vld [vmem:[#allocation7 + $0x30] sm:$0xf]
        %v404 = vld [vmem:[#allocation7 + $0x34] sm:$0xf]
        %v405 = vld [vmem:[#allocation7 + $0x38] sm:$0xf]
        %v406 = vld [vmem:[#allocation7 + $0x3c] sm:$0xf]
        %v407 = vld [vmem:[#allocation7 + $0x40] sm:$0xf]
        %v408 = vld [vmem:[#allocation7 + $0x44] sm:$0xf]
        %v409 = vld [vmem:[#allocation7 + $0x48] sm:$0xf]
        %v410 = vld [vmem:[#allocation7 + $0x4c] sm:$0xf]
        %v411 = vld [vmem:[#allocation7 + $0x50] sm:$0xf]
        %v412 = vld [vmem:[#allocation7 + $0x54] sm:$0xf]
        %v413 = vld [vmem:[#allocation7 + $0x58] sm:$0xf]
        %v414 = vld [vmem:[#allocation7 + $0x5c] sm:$0xf]
        %v415 = vld [vmem:[#allocation7 + $0x60] sm:$0xf]
        %v416 = vld [vmem:[#allocation7 + $0x64] sm:$0xf]
        %v417 = vld [vmem:[#allocation7 + $0x68] sm:$0xf]
        %v418 = vld [vmem:[#allocation7 + $0x6c] sm:$0xf]
        %v419 = vld [vmem:[#allocation7 + $0x70] sm:$0xf]
        %v420 = vld [vmem:[#allocation7 + $0x74] sm:$0xf]
        %v421 = vld [vmem:[#allocation7 + $0x78] sm:$0xf]
        %v422 = vld [vmem:[#allocation7 + $0x7c] sm:$0xf]
        %v423 = vld [vmem:[#allocation7 + $0x80] sm:$0xf]
        %v424 = vld [vmem:[#allocation7 + $0x84] sm:$0xf]
        %v425 = vld [vmem:[#allocation7 + $0x88] sm:$0xf]
        %v426 = vld [vmem:[#allocation7 + $0x8c] sm:$0xf]
        %v427 = vld [vmem:[#allocation7 + $0x90] sm:$0xf]
        %v428 = vld [vmem:[#allocation7 + $0x94] sm:$0xf]
        %v429 = vld [vmem:[#allocation7 + $0x98] sm:$0xf]
        %v430 = vld [vmem:[#allocation7 + $0x9c] sm:$0xf]
        %v431 = vld [vmem:[#allocation7 + $0xa0] sm:$0xf]
        %v432 = vld [vmem:[#allocation7 + $0xa4] sm:$0xf]
        %v433 = vld [vmem:[#allocation7 + $0xa8] sm:$0xf]
        %v434 = vld [vmem:[#allocation7 + $0xac] sm:$0xf]
        %v435 = vld [vmem:[#allocation7 + $0xb0] sm:$0xf]
        %v436 = vld [vmem:[#allocation7 + $0xb4] sm:$0xf]
        %v437 = vld [vmem:[#allocation7 + $0xb8] sm:$0xf]
        %v438 = vld [vmem:[#allocation7 + $0xbc] sm:$0xf]
        %v439 = vld [vmem:[%s2] sm:$0x1]
        %v441 = vlaneseq
        %v442 = vshrl.u32 %v441, 7
        %v443 = vsub.s32 0, %v442
        %v444 = vrot.slane %v439, %v443
        %vm446 = vcmask 1045504
        %v447 = vrot.slane %v383, 2
        %v448 = vrot.slane %v384, 2
        %v449 = vsel %vm446, %v447, %v448
        %v450 = vrot.slane %v388, 2
        %v451 = vrot.slane %v387, 2
        %v452 = vsel %vm446, %v450, %v451
        %v453 = vrot.slane %v390, 2
        %v454 = vsel %vm446, %v453, %v453
        %v506 = vunpack.c.l.b16 %v391
        %v507 = vunpack.c.l.b16 %v392
        %v508 = vunpack.c.l.b16 %v393
        %v509 = vunpack.c.l.b16 %v394
        %v510 = vunpack.c.l.b16 %v395
        %v511 = vunpack.c.l.b16 %v396
        %v512 = vunpack.c.l.b16 %v397
        %v513 = vunpack.c.l.b16 %v398
        %v514 = vunpack.c.l.b16 %v399
        %v515 = vunpack.c.l.b16 %v400
        %v516 = vunpack.c.l.b16 %v401
        %v517 = vunpack.c.l.b16 %v402
        %v518 = vunpack.c.l.b16 %v403
        %v519 = vunpack.c.l.b16 %v404
        %v520 = vunpack.c.l.b16 %v405
        %v521 = vunpack.c.l.b16 %v406
        %v522 = vunpack.c.l.b16 %v407
        %v523 = vunpack.c.l.b16 %v408
        %v524 = vunpack.c.l.b16 %v409
        %v525 = vunpack.c.l.b16 %v410
        %v526 = vunpack.c.l.b16 %v411
        %v527 = vunpack.c.l.b16 %v412
        %v528 = vunpack.c.l.b16 %v413
        %v529 = vunpack.c.l.b16 %v414
        %v530 = vunpack.c.l.b16 %v415
        %v531 = vunpack.c.l.b16 %v416
        %v532 = vunpack.c.l.b16 %v417
        %v533 = vunpack.c.l.b16 %v418
        %v534 = vunpack.c.l.b16 %v419
        %v535 = vunpack.c.l.b16 %v420
        %v536 = vunpack.c.l.b16 %v421
        %v537 = vunpack.c.l.b16 %v422
        %v538 = vunpack.c.l.b16 %v423
        %v539 = vunpack.c.l.b16 %v424
        %v540 = vunpack.c.l.b16 %v425
        %v541 = vunpack.c.l.b16 %v426
        %v542 = vunpack.c.l.b16 %v427
        %v543 = vunpack.c.l.b16 %v428
        %v544 = vunpack.c.l.b16 %v429
        %v545 = vunpack.c.l.b16 %v430
        %v546 = vunpack.c.l.b16 %v431
        %v547 = vunpack.c.l.b16 %v432
        %v548 = vunpack.c.l.b16 %v433
        %v549 = vunpack.c.l.b16 %v434
        %v550 = vunpack.c.l.b16 %v435
        %v551 = vunpack.c.l.b16 %v436
        %v552 = vunpack.c.l.b16 %v437
        %v553 = vunpack.c.l.b16 %v438
        %v554 = vpack.c.b16 %v507, %v506
        %v555 = vpack.c.b16 %v509, %v508
        %v556 = vpack.c.b16 %v511, %v510
        %v557 = vpack.c.b16 %v513, %v512
        %v558 = vpack.c.b16 %v515, %v514
        %v559 = vpack.c.b16 %v517, %v516
        %v560 = vpack.c.b16 %v519, %v518
        %v561 = vpack.c.b16 %v521, %v520
        %v562 = vpack.c.b16 %v523, %v522
        %v563 = vpack.c.b16 %v525, %v524
        %v564 = vpack.c.b16 %v527, %v526
        %v565 = vpack.c.b16 %v529, %v528
        %v566 = vpack.c.b16 %v531, %v530
        %v567 = vpack.c.b16 %v533, %v532
        %v568 = vpack.c.b16 %v535, %v534
        %v569 = vpack.c.b16 %v537, %v536
        %v570 = vpack.c.b16 %v539, %v538
        %v571 = vpack.c.b16 %v541, %v540
        %v572 = vpack.c.b16 %v543, %v542
        %v573 = vpack.c.b16 %v545, %v544
        %v574 = vpack.c.b16 %v547, %v546
        %v575 = vpack.c.b16 %v549, %v548
        %v576 = vpack.c.b16 %v551, %v550
        %v577 = vpack.c.b16 %v553, %v552
        %602 = vmatprep.subr.bf16.mxu0 0
        %603 = vmatpush1.bf16.msra.mxu0 %v561
        %604 = vmatprep.subr.bf16.mxu0 0
        %605 = vmatpush1.bf16.msra.mxu0 %v560
        %606 = vmatprep.subr.bf16.mxu0 0
        %607 = vmatpush1.bf16.msra.mxu0 %v559
        %608 = vmatprep.subr.bf16.mxu0 0
        %609 = vmatpush1.bf16.msra.mxu0 %v558
        %610 = vmatprep.subr.bf16.mxu0 0
        %611 = vmatpush1.bf16.msra.mxu0 %v557
        %612 = vmatprep.subr.bf16.mxu0 0
        %613 = vmatpush1.bf16.msra.mxu0 %v556
        %614 = vmatprep.subr.bf16.mxu0 0
        %615 = vmatpush1.bf16.msra.mxu0 %v555
        %616 = vmatprep.subr.bf16.mxu0 0
        %617 = vmatpush1.bf16.msra.mxu0 %v554
        %618 = vmatprep.subr.bf16.mxu0 0
        %619 = vmatpush2.bf16.msra.mxu0 %v569
        %620 = vmatprep.subr.bf16.mxu0 0
        %621 = vmatpush2.bf16.msra.mxu0 %v568
        %622 = vmatprep.subr.bf16.mxu0 0
        %623 = vmatpush2.bf16.msra.mxu0 %v567
        %624 = vmatprep.subr.bf16.mxu0 0
        %625 = vmatpush2.bf16.msra.mxu0 %v566
        %626 = vmatprep.subr.bf16.mxu0 0
        %627 = vmatpush2.bf16.msra.mxu0 %v565
        %628 = vmatprep.subr.bf16.mxu0 0
        %629 = vmatpush2.bf16.msra.mxu0 %v564
        %630 = vmatprep.subr.bf16.mxu0 0
        %631 = vmatpush2.bf16.msra.mxu0 %v563
        %632 = vmatprep.subr.bf16.mxu0 0
        %633 = vmatpush2.bf16.msra.mxu0 %v562
        %634 = vmatprep.mubr.bf16.mxu0 %v452
        %635 = vmatmul.mubr.bf16.gmra.mxu0 %v449
        %v636 = vpop.f32.mrf.mxu0
        %v637 = vadd.f32 %v444, %v636
        %v638 = vpop.f32.mrf.mxu0
        %v639 = vpop.f32.mrf.mxu0
        %v640 = vadd.f32 %v444, %v639
        %v641 = vpop.f32.mrf.mxu0
        %642 = vdwg.mxu0
        %643 = vmatprep.subr.bf16.mxu0 0
        %644 = vmatpush1.bf16.msra.mxu0 %v577
        %645 = vmatprep.subr.bf16.mxu0 0
        %646 = vmatpush1.bf16.msra.mxu0 %v576
        %647 = vmatprep.subr.bf16.mxu0 0
        %648 = vmatpush1.bf16.msra.mxu0 %v575
        %649 = vmatprep.subr.bf16.mxu0 0
        %650 = vmatpush1.bf16.msra.mxu0 %v574
        %651 = vmatprep.subr.bf16.mxu0 0
        %652 = vmatpush1.bf16.msra.mxu0 %v573
        %653 = vmatprep.subr.bf16.mxu0 0
        %654 = vmatpush1.bf16.msra.mxu0 %v572
        %655 = vmatprep.subr.bf16.mxu0 0
        %656 = vmatpush1.bf16.msra.mxu0 %v571
        %657 = vmatprep.subr.bf16.mxu0 0
        %658 = vmatpush1.bf16.msra.mxu0 %v570
        %659 = vmatprep.subr.bf16.mxu0 0
        %660 = vmatpush2.bf16.msra.mxu0 0
        %661 = vmatprep.subr.bf16.mxu0 0
        %662 = vmatpush2.bf16.msra.mxu0 0
        %663 = vmatprep.subr.bf16.mxu0 0
        %664 = vmatpush2.bf16.msra.mxu0 0
        %665 = vmatprep.subr.bf16.mxu0 0
        %666 = vmatpush2.bf16.msra.mxu0 0
        %667 = vmatprep.subr.bf16.mxu0 0
        %668 = vmatpush2.bf16.msra.mxu0 0
        %669 = vmatprep.subr.bf16.mxu0 0
        %670 = vmatpush2.bf16.msra.mxu0 0
        %671 = vmatprep.subr.bf16.mxu0 0
        %672 = vmatpush2.bf16.msra.mxu0 0
        %673 = vmatprep.subr.bf16.mxu0 0
        %674 = vmatpush2.bf16.msra.mxu0 0
        %675 = vmatprep.mubr.bf16.mxu0 0
        %676 = vmatmul.mubr.bf16.gmra.mxu0 %v454
        %v677 = vpop.f32.mrf.mxu0
        %v678 = vadd.f32 %v637, %v677
        %v679 = vpop.f32.mrf.mxu0
        %v680 = vpop.f32.mrf.mxu0
        %v681 = vadd.f32 %v640, %v680
        %v682 = vpop.f32.mrf.mxu0
        %683 = vdwg.mxu0
        %v684 = vmax.f32 %v678, 0.0
        %v685 = vmax.f32 %v681, 0.0
        %v686 = vpack.c.bf16 %v685, %v684
        %v688 = vunpack.c.l.b16 %v686
        %v689 = vunpack.c.h.b16 %v686
        %v690 = vpack.c.b16 %v688, %v688
        %v691 = vpack.c.b16 %v689, %v689
        %694 = vst [vmem:[#allocation3 + $0x8] sm:$0xf] %v690
        %695 = vst [vmem:[#allocation3 + $0xc] sm:$0xf] %v691
        %v696 = vld [vmem:[#allocation3 + $0x4] sm:$0xf]
        %v697 = vld [vmem:[#allocation3 + $0x8] sm:$0xf]
        %v698 = vld [vmem:[#allocation3 + $0xc] sm:$0xf]
        %v702 = vunpack.c.l.b16 %v696
        %v703 = vunpack.c.l.b16 %v697
        %v704 = vunpack.c.l.b16 %v698
        %v705 = vpack.c.b16 %v703, %v702
        %v706 = vpack.c.b16 %v704, %v704
        %v707 = vrot.slane %v705, 1
        %v708 = vrot.slane %v706, 1
        %v709 = vsel %vm385, %v707, %v708
        %v710 = vpack.c.b16 %v704, %v703
        %v711 = vrot.slane %v710, 6
        %v712 = vld [vmem:[#allocation9] sm:$0xf]
        %v713 = vld [vmem:[#allocation9 + $0x4] sm:$0xf]
        %v714 = vld [vmem:[#allocation9 + $0x8] sm:$0xf]
        %v715 = vld [vmem:[#allocation9 + $0xc] sm:$0xf]
        %v716 = vld [vmem:[#allocation9 + $0x10] sm:$0xf]
        %v717 = vld [vmem:[#allocation9 + $0x14] sm:$0xf]
        %v718 = vld [vmem:[#allocation9 + $0x18] sm:$0xf]
        %v719 = vld [vmem:[#allocation9 + $0x1c] sm:$0xf]
        %v720 = vld [vmem:[#allocation9 + $0x20] sm:$0xf]
        %v721 = vld [vmem:[#allocation9 + $0x24] sm:$0xf]
        %v722 = vld [vmem:[#allocation9 + $0x28] sm:$0xf]
        %v723 = vld [vmem:[#allocation9 + $0x2c] sm:$0xf]
        %v724 = vld [vmem:[#allocation9 + $0x30] sm:$0xf]
        %v725 = vld [vmem:[#allocation9 + $0x34] sm:$0xf]
        %v726 = vld [vmem:[#allocation9 + $0x38] sm:$0xf]
        %v727 = vld [vmem:[#allocation9 + $0x3c] sm:$0xf]
        %v728 = vld [vmem:[#allocation9 + $0x40] sm:$0xf]
        %v729 = vld [vmem:[#allocation9 + $0x44] sm:$0xf]
        %v730 = vld [vmem:[#allocation9 + $0x48] sm:$0xf]
        %v731 = vld [vmem:[#allocation9 + $0x4c] sm:$0xf]
        %v732 = vld [vmem:[#allocation9 + $0x50] sm:$0xf]
        %v733 = vld [vmem:[#allocation9 + $0x54] sm:$0xf]
        %v734 = vld [vmem:[#allocation9 + $0x58] sm:$0xf]
        %v735 = vld [vmem:[#allocation9 + $0x5c] sm:$0xf]
        %v736 = vld [vmem:[#allocation9 + $0x60] sm:$0xf]
        %v737 = vld [vmem:[#allocation9 + $0x64] sm:$0xf]
        %v738 = vld [vmem:[#allocation9 + $0x68] sm:$0xf]
        %v739 = vld [vmem:[#allocation9 + $0x6c] sm:$0xf]
        %v740 = vld [vmem:[#allocation9 + $0x70] sm:$0xf]
        %v741 = vld [vmem:[#allocation9 + $0x74] sm:$0xf]
        %v742 = vld [vmem:[#allocation9 + $0x78] sm:$0xf]
        %v743 = vld [vmem:[#allocation9 + $0x7c] sm:$0xf]
        %v744 = vld [vmem:[#allocation9 + $0x80] sm:$0xf]
        %v745 = vld [vmem:[#allocation9 + $0x84] sm:$0xf]
        %v746 = vld [vmem:[#allocation9 + $0x88] sm:$0xf]
        %v747 = vld [vmem:[#allocation9 + $0x8c] sm:$0xf]
        %v748 = vld [vmem:[#allocation9 + $0x90] sm:$0xf]
        %v749 = vld [vmem:[#allocation9 + $0x94] sm:$0xf]
        %v750 = vld [vmem:[#allocation9 + $0x98] sm:$0xf]
        %v751 = vld [vmem:[#allocation9 + $0x9c] sm:$0xf]
        %v752 = vld [vmem:[#allocation9 + $0xa0] sm:$0xf]
        %v753 = vld [vmem:[#allocation9 + $0xa4] sm:$0xf]
        %v754 = vld [vmem:[#allocation9 + $0xa8] sm:$0xf]
        %v755 = vld [vmem:[#allocation9 + $0xac] sm:$0xf]
        %v756 = vld [vmem:[#allocation9 + $0xb0] sm:$0xf]
        %v757 = vld [vmem:[#allocation9 + $0xb4] sm:$0xf]
        %v758 = vld [vmem:[#allocation9 + $0xb8] sm:$0xf]
        %v759 = vld [vmem:[#allocation9 + $0xbc] sm:$0xf]
        %v760 = vld [vmem:[%s4] sm:$0x1]
        %v762 = vlaneseq
        %v763 = vshrl.u32 %v762, 7
        %v764 = vsub.s32 0, %v763
        %v765 = vrot.slane %v760, %v764
        %v767 = vrot.slane %v705, 2
        %v768 = vrot.slane %v706, 2
        %v769 = vsel %vm446, %v767, %v768
        %v770 = vrot.slane %v709, 2
        %v771 = vrot.slane %v708, 2
        %v772 = vsel %vm446, %v770, %v771
        %v773 = vrot.slane %v711, 2
        %v774 = vsel %vm446, %v773, %v773
        %v826 = vunpack.c.l.b16 %v712
        %v827 = vunpack.c.l.b16 %v713
        %v828 = vunpack.c.l.b16 %v714
        %v829 = vunpack.c.l.b16 %v715
        %v830 = vunpack.c.l.b16 %v716
        %v831 = vunpack.c.l.b16 %v717
        %v832 = vunpack.c.l.b16 %v718
        %v833 = vunpack.c.l.b16 %v719
        %v834 = vunpack.c.l.b16 %v720
        %v835 = vunpack.c.l.b16 %v721
        %v836 = vunpack.c.l.b16 %v722
        %v837 = vunpack.c.l.b16 %v723
        %v838 = vunpack.c.l.b16 %v724
        %v839 = vunpack.c.l.b16 %v725
        %v840 = vunpack.c.l.b16 %v726
        %v841 = vunpack.c.l.b16 %v727
        %v842 = vunpack.c.l.b16 %v728
        %v843 = vunpack.c.l.b16 %v729
        %v844 = vunpack.c.l.b16 %v730
        %v845 = vunpack.c.l.b16 %v731
        %v846 = vunpack.c.l.b16 %v732
        %v847 = vunpack.c.l.b16 %v733
        %v848 = vunpack.c.l.b16 %v734
        %v849 = vunpack.c.l.b16 %v735
        %v850 = vunpack.c.l.b16 %v736
        %v851 = vunpack.c.l.b16 %v737
        %v852 = vunpack.c.l.b16 %v738
        %v853 = vunpack.c.l.b16 %v739
        %v854 = vunpack.c.l.b16 %v740
        %v855 = vunpack.c.l.b16 %v741
        %v856 = vunpack.c.l.b16 %v742
        %v857 = vunpack.c.l.b16 %v743
        %v858 = vunpack.c.l.b16 %v744
        %v859 = vunpack.c.l.b16 %v745
        %v860 = vunpack.c.l.b16 %v746
        %v861 = vunpack.c.l.b16 %v747
        %v862 = vunpack.c.l.b16 %v748
        %v863 = vunpack.c.l.b16 %v749
        %v864 = vunpack.c.l.b16 %v750
        %v865 = vunpack.c.l.b16 %v751
        %v866 = vunpack.c.l.b16 %v752
        %v867 = vunpack.c.l.b16 %v753
        %v868 = vunpack.c.l.b16 %v754
        %v869 = vunpack.c.l.b16 %v755
        %v870 = vunpack.c.l.b16 %v756
        %v871 = vunpack.c.l.b16 %v757
        %v872 = vunpack.c.l.b16 %v758
        %v873 = vunpack.c.l.b16 %v759
        %v874 = vpack.c.b16 %v827, %v826
        %v875 = vpack.c.b16 %v829, %v828
        %v876 = vpack.c.b16 %v831, %v830
        %v877 = vpack.c.b16 %v833, %v832
        %v878 = vpack.c.b16 %v835, %v834
        %v879 = vpack.c.b16 %v837, %v836
        %v880 = vpack.c.b16 %v839, %v838
        %v881 = vpack.c.b16 %v841, %v840
        %v882 = vpack.c.b16 %v843, %v842
        %v883 = vpack.c.b16 %v845, %v844
        %v884 = vpack.c.b16 %v847, %v846
        %v885 = vpack.c.b16 %v849, %v848
        %v886 = vpack.c.b16 %v851, %v850
        %v887 = vpack.c.b16 %v853, %v852
        %v888 = vpack.c.b16 %v855, %v854
        %v889 = vpack.c.b16 %v857, %v856
        %v890 = vpack.c.b16 %v859, %v858
        %v891 = vpack.c.b16 %v861, %v860
        %v892 = vpack.c.b16 %v863, %v862
        %v893 = vpack.c.b16 %v865, %v864
        %v894 = vpack.c.b16 %v867, %v866
        %v895 = vpack.c.b16 %v869, %v868
        %v896 = vpack.c.b16 %v871, %v870
        %v897 = vpack.c.b16 %v873, %v872
        %922 = vmatprep.subr.bf16.mxu0 0
        %923 = vmatpush1.bf16.msra.mxu0 %v881
        %924 = vmatprep.subr.bf16.mxu0 0
        %925 = vmatpush1.bf16.msra.mxu0 %v880
        %926 = vmatprep.subr.bf16.mxu0 0
        %927 = vmatpush1.bf16.msra.mxu0 %v879
        %928 = vmatprep.subr.bf16.mxu0 0
        %929 = vmatpush1.bf16.msra.mxu0 %v878
        %930 = vmatprep.subr.bf16.mxu0 0
        %931 = vmatpush1.bf16.msra.mxu0 %v877
        %932 = vmatprep.subr.bf16.mxu0 0
        %933 = vmatpush1.bf16.msra.mxu0 %v876
        %934 = vmatprep.subr.bf16.mxu0 0
        %935 = vmatpush1.bf16.msra.mxu0 %v875
        %936 = vmatprep.subr.bf16.mxu0 0
        %937 = vmatpush1.bf16.msra.mxu0 %v874
        %938 = vmatprep.subr.bf16.mxu0 0
        %939 = vmatpush2.bf16.msra.mxu0 %v889
        %940 = vmatprep.subr.bf16.mxu0 0
        %941 = vmatpush2.bf16.msra.mxu0 %v888
        %942 = vmatprep.subr.bf16.mxu0 0
        %943 = vmatpush2.bf16.msra.mxu0 %v887
        %944 = vmatprep.subr.bf16.mxu0 0
        %945 = vmatpush2.bf16.msra.mxu0 %v886
        %946 = vmatprep.subr.bf16.mxu0 0
        %947 = vmatpush2.bf16.msra.mxu0 %v885
        %948 = vmatprep.subr.bf16.mxu0 0
        %949 = vmatpush2.bf16.msra.mxu0 %v884
        %950 = vmatprep.subr.bf16.mxu0 0
        %951 = vmatpush2.bf16.msra.mxu0 %v883
        %952 = vmatprep.subr.bf16.mxu0 0
        %953 = vmatpush2.bf16.msra.mxu0 %v882
        %954 = vmatprep.mubr.bf16.mxu0 %v772
        %955 = vmatmul.mubr.bf16.gmra.mxu0 %v769
        %v956 = vpop.f32.mrf.mxu0
        %v957 = vadd.f32 %v765, %v956
        %v958 = vpop.f32.mrf.mxu0
        %v959 = vpop.f32.mrf.mxu0
        %v960 = vadd.f32 %v765, %v959
        %v961 = vpop.f32.mrf.mxu0
        %962 = vdwg.mxu0
        %963 = vmatprep.subr.bf16.mxu0 0
        %964 = vmatpush1.bf16.msra.mxu0 %v897
        %965 = vmatprep.subr.bf16.mxu0 0
        %966 = vmatpush1.bf16.msra.mxu0 %v896
        %967 = vmatprep.subr.bf16.mxu0 0
        %968 = vmatpush1.bf16.msra.mxu0 %v895
        %969 = vmatprep.subr.bf16.mxu0 0
        %970 = vmatpush1.bf16.msra.mxu0 %v894
        %971 = vmatprep.subr.bf16.mxu0 0
        %972 = vmatpush1.bf16.msra.mxu0 %v893
        %973 = vmatprep.subr.bf16.mxu0 0
        %974 = vmatpush1.bf16.msra.mxu0 %v892
        %975 = vmatprep.subr.bf16.mxu0 0
        %976 = vmatpush1.bf16.msra.mxu0 %v891
        %977 = vmatprep.subr.bf16.mxu0 0
        %978 = vmatpush1.bf16.msra.mxu0 %v890
        %979 = vmatprep.subr.bf16.mxu0 0
        %980 = vmatpush2.bf16.msra.mxu0 0
        %981 = vmatprep.subr.bf16.mxu0 0
        %982 = vmatpush2.bf16.msra.mxu0 0
        %983 = vmatprep.subr.bf16.mxu0 0
        %984 = vmatpush2.bf16.msra.mxu0 0
        %985 = vmatprep.subr.bf16.mxu0 0
        %986 = vmatpush2.bf16.msra.mxu0 0
        %987 = vmatprep.subr.bf16.mxu0 0
        %988 = vmatpush2.bf16.msra.mxu0 0
        %989 = vmatprep.subr.bf16.mxu0 0
        %990 = vmatpush2.bf16.msra.mxu0 0
        %991 = vmatprep.subr.bf16.mxu0 0
        %992 = vmatpush2.bf16.msra.mxu0 0
        %993 = vmatprep.subr.bf16.mxu0 0
        %994 = vmatpush2.bf16.msra.mxu0 0
        %995 = vmatprep.mubr.bf16.mxu0 0
        %996 = vmatmul.mubr.bf16.gmra.mxu0 %v774
        %v997 = vpop.f32.mrf.mxu0
        %v998 = vadd.f32 %v957, %v997
        %v999 = vpop.f32.mrf.mxu0
        %v1000 = vpop.f32.mrf.mxu0
        %v1001 = vadd.f32 %v960, %v1000
        %v1002 = vpop.f32.mrf.mxu0
        %1003 = vdwg.mxu0
        %v1004 = vmax.f32 %v998, 0.0
        %v1005 = vmax.f32 %v1001, 0.0
        %v1006 = vld [vmem:[#allocation10] sm:$0xf]
        %v1007 = vld [vmem:[#allocation10 + $0x4] sm:$0xf]
        %v1008 = vld [vmem:[#allocation10 + $0x8] sm:$0xf]
        %v1009 = vld [vmem:[#allocation10 + $0xc] sm:$0xf]
        %v1010 = vld [vmem:[#allocation10 + $0x10] sm:$0xf]
        %v1011 = vld [vmem:[#allocation10 + $0x14] sm:$0xf]
        %v1012 = vld [vmem:[#allocation10 + $0x18] sm:$0xf]
        %v1013 = vld [vmem:[#allocation10 + $0x1c] sm:$0xf]
        %v1014 = vld [vmem:[#allocation10 + $0x20] sm:$0xf]
        %v1015 = vld [vmem:[#allocation10 + $0x24] sm:$0xf]
        %v1016 = vld [vmem:[#allocation10 + $0x28] sm:$0xf]
        %v1017 = vld [vmem:[#allocation10 + $0x2c] sm:$0xf]
        %v1018 = vld [vmem:[#allocation10 + $0x30] sm:$0xf]
        %v1019 = vld [vmem:[#allocation10 + $0x34] sm:$0xf]
        %v1020 = vld [vmem:[#allocation10 + $0x38] sm:$0xf]
        %v1021 = vld [vmem:[#allocation10 + $0x3c] sm:$0xf]
        %v1022 = vld [vmem:[%s6] sm:$0x1]
        %v1024 = vlaneseq
        %v1025 = vshrl.u32 %v1024, 7
        %v1026 = vsub.s32 0, %v1025
        %v1027 = vrot.slane %v1022, %v1026
        %v1031 = vunpack.c.l.b16 %v370
        %v1032 = vunpack.c.l.b16 %v371
        %v1033 = vpack.c.b16 %v1032, %v1031
        %v1051 = vunpack.c.l.b16 %v1006
        %v1052 = vunpack.c.l.b16 %v1007
        %v1053 = vunpack.c.l.b16 %v1008
        %v1054 = vunpack.c.l.b16 %v1009
        %v1055 = vunpack.c.l.b16 %v1010
        %v1056 = vunpack.c.l.b16 %v1011
        %v1057 = vunpack.c.l.b16 %v1012
        %v1058 = vunpack.c.l.b16 %v1013
        %v1059 = vunpack.c.l.b16 %v1014
        %v1060 = vunpack.c.l.b16 %v1015
        %v1061 = vunpack.c.l.b16 %v1016
        %v1062 = vunpack.c.l.b16 %v1017
        %v1063 = vunpack.c.l.b16 %v1018
        %v1064 = vunpack.c.l.b16 %v1019
        %v1065 = vunpack.c.l.b16 %v1020
        %v1066 = vunpack.c.l.b16 %v1021
        %v1067 = vpack.c.b16 %v1052, %v1051
        %v1068 = vpack.c.b16 %v1054, %v1053
        %v1069 = vpack.c.b16 %v1056, %v1055
        %v1070 = vpack.c.b16 %v1058, %v1057
        %v1071 = vpack.c.b16 %v1060, %v1059
        %v1072 = vpack.c.b16 %v1062, %v1061
        %v1073 = vpack.c.b16 %v1064, %v1063
        %v1074 = vpack.c.b16 %v1066, %v1065
        %1083 = vmatprep.subr.bf16.mxu0 0
        %1084 = vmatpush1.bf16.msra.mxu0 %v1074
        %1085 = vmatprep.subr.bf16.mxu0 0
        %1086 = vmatpush1.bf16.msra.mxu0 %v1073
        %1087 = vmatprep.subr.bf16.mxu0 0
        %1088 = vmatpush1.bf16.msra.mxu0 %v1072
        %1089 = vmatprep.subr.bf16.mxu0 0
        %1090 = vmatpush1.bf16.msra.mxu0 %v1071
        %1091 = vmatprep.subr.bf16.mxu0 0
        %1092 = vmatpush1.bf16.msra.mxu0 %v1070
        %1093 = vmatprep.subr.bf16.mxu0 0
        %1094 = vmatpush1.bf16.msra.mxu0 %v1069
        %1095 = vmatprep.subr.bf16.mxu0 0
        %1096 = vmatpush1.bf16.msra.mxu0 %v1068
        %1097 = vmatprep.subr.bf16.mxu0 0
        %1098 = vmatpush1.bf16.msra.mxu0 %v1067
        %1099 = vmatprep.subr.bf16.mxu0 0
        %1100 = vmatpush2.bf16.msra.mxu0 0
        %1101 = vmatprep.subr.bf16.mxu0 0
        %1102 = vmatpush2.bf16.msra.mxu0 0
        %1103 = vmatprep.subr.bf16.mxu0 0
        %1104 = vmatpush2.bf16.msra.mxu0 0
        %1105 = vmatprep.subr.bf16.mxu0 0
        %1106 = vmatpush2.bf16.msra.mxu0 0
        %1107 = vmatprep.subr.bf16.mxu0 0
        %1108 = vmatpush2.bf16.msra.mxu0 0
        %1109 = vmatprep.subr.bf16.mxu0 0
        %1110 = vmatpush2.bf16.msra.mxu0 0
        %1111 = vmatprep.subr.bf16.mxu0 0
        %1112 = vmatpush2.bf16.msra.mxu0 0
        %1113 = vmatprep.subr.bf16.mxu0 0
        %1114 = vmatpush2.bf16.msra.mxu0 0
        %1115 = vmatprep.mubr.bf16.mxu0 0
        %1116 = vmatmul.mubr.bf16.gmra.mxu0 %v1033
        %v1117 = vpop.f32.mrf.mxu0
        %v1118 = vadd.f32 %v1027, %v1117
        %v1119 = vpop.f32.mrf.mxu0
        %v1120 = vpop.f32.mrf.mxu0
        %v1121 = vadd.f32 %v1027, %v1120
        %v1122 = vpop.f32.mrf.mxu0
        %1123 = vdwg.mxu0
        %v1124 = vadd.f32 %v1004, %v1118
        %v1125 = vadd.f32 %v1005, %v1121
        %v1126 = vmax.f32 %v1124, 0.0
        %v1127 = vmax.f32 %v1125, 0.0
        %v1128 = vpack.c.bf16 %v1127, %v1126
        %v1130 = vunpack.c.l.b16 %v1128
        %v1131 = vunpack.c.h.b16 %v1128
        %v1132 = vpack.c.b16 %v1130, %v1130
        %v1133 = vpack.c.b16 %v1131, %v1131
        %1136 = vst [vmem:[%s358] sm:$0xf] %v1132
        %1137 = vst [vmem:[%s358 + $0x4] sm:$0xf] %v1133
        %1138 = vst [vmem:[#allocation2] sm:$0xf] %v375
        %1139 = vst [vmem:[#allocation2 + $0x4] sm:$0xf] %v376
        %1140 = vst [vmem:[#allocation3] sm:$0xf] %v697
        %1141 = vst [vmem:[#allocation3 + $0x4] sm:$0xf] %v698
        %s1142 = sand.u32 %s202, 1
        %s1143 = scalar_lea.sflag [#allocation6], %s1142
        %s1144 = sand.u32 %s202, 1
        %s1145 = smul.addr %s1144, 8
        %s1146 = scalar_lea.vmem [#allocation12], %s1145
        // Predicated region
        $region69: #{tpu_custom_call.1} parent=47 // pred_check
          %p1147 = pneg %p212
        $region70: #{tpu_custom_call.1} parent=47 // pred_check_branch
          %1149 = sbr.rel (%p1147) target = $region72
        $region71: #{tpu_custom_call.1} parent=47 // pred_region
          %s1150 = smul.u32 2, %s31
          %s1152 = ssub.s32 128, 128
          %1153 = vsyncadd %s1143, %s1152
          %s1154 = smul.addr %s30, 2
          %s1155 = sadd.s32 %s1150, %s1154
          %s1156 = smul.addr %s1155, 64
          %s1157 = scalar_lea.hbm %s7, %s1156
          %s1158 = sshll.u32 %s1146, 4
          %s1159 = int_to_ptr.vmem [resolvable:$true] %s1158
          %1164 = dma.vmem_to_hbm [thread:$0]  %s1159, 128, %s1157, %s1143, 64, 64, 4
        $region72: #{tpu_custom_call.1} parent=47 // pred_fallthru
          _
      $region48: #{tpu_custom_call.1} parent=5 // pred_fallthru
        _
      %p1165 = scmp.le.s32.totalorder 2, %s21
      // Predicated region
      $region73: #{tpu_custom_call.1} parent=5 // pred_check
        %p1166 = pneg %p1165
      $region74: #{tpu_custom_call.1} parent=5 // pred_check_branch
        %1168 = sbr.rel (%p1166) target = $region76
      $region75: #{tpu_custom_call.1} parent=5 // pred_region
        %s1169 = ssub.s32 %s21, 2
        // Predicated region
        $region77: #{tpu_custom_call.1} parent=75 // pred_check
          %p1170 = pneg %p218
        $region78: #{tpu_custom_call.1} parent=75 // pred_check_branch
          %1172 = sbr.rel (%p1170) target = $region80
        $region79: #{tpu_custom_call.1} parent=75 // pred_region
          %s1173 = sand.u32 %s203, 1
          %s1174 = scalar_lea.sflag [#allocation6], %s1173
          %s1175 = sand.u32 %s203, 1
          %s1176 = smul.addr %s1175, 8
          %s1177 = scalar_lea.vmem [#allocation12], %s1176
          %1178 = dma.done %s1174, 128
        $region80: #{tpu_custom_call.1} parent=75 // pred_fallthru
          _
      $region76: #{tpu_custom_call.1} parent=5 // pred_fallthru
        _
    $region6: #{tpu_custom_call.1} parent=1 // loop_footer
      %s25 = sadd.s32 1, %s21
    $region7: #{tpu_custom_call.1} parent=1 // loop_footer_branch
      %20 = sbr.rel target = $region3
    $region8: #{tpu_custom_call.1} parent=1 // loop_exit
      _
    %1179 = vsyncpa [#allocation5], 1
    %s1180 = scalar_lea.sflag [#allocation5], 1
    %1181 = vsyncpa %s1180, 1
    %1182 = vsyncpa [#allocation8], 1
    %1183 = vsyncpa [#allocation11], 1
    %1184 = vsyncpa [#allocation6], 1
    %s1185 = scalar_lea.sflag [#allocation6], 1
    %1186 = vsyncpa %s1185, 1

</llo_original>
